<compile_context>
chip_gen: v6e
topology: v6e:2x2x1
jax: 0.10.0
libtpu: 0.0.40
codegen_flags: <defaults>
</compile_context>

<pallas_src>
import jax
import jax.numpy as jnp
from jax.experimental import pallas as pl
from jax.experimental.pallas import tpu as pltpu


def _round_up(a, m):
    return ((a + m - 1) // m) * m


def _chip_profile():
    """Returns (num_tensorcores, usable scoped-VMEM cap in bytes); conservative fallback."""
    kind = ""
    try:
        kind = jax.devices()[0].device_kind.lower()
    except Exception:
        pass
    num_tc = 2 if "v7" in kind else 1                    # v7x: 2 TCs/chip; v5e/v6e: 1
    if ("v6" in kind) or ("v5e" in kind) or ("v5 lite" in kind) or ("v5litepod" in kind):
        vmem_cap = 100 * 1024 * 1024                     # 128 MiB physical on v5e/v6e
    else:
        vmem_cap = 48 * 1024 * 1024                      # v7x: 64 MiB/TC physical; unknown: safe
    return num_tc, vmem_cap


def _per_elem_vmem_bytes(compute_itemsize):
    """Rough per-batch-element VMEM working set for one grid step (worst case)."""
    x_block = 128 * 4 * 2                                 # [tb,6] f32 block, minor dim padded to
                                                          # 128 lanes in VMEM, double-buffered
    h_live = 128 * 4 + 128 * 4 + 128 * compute_itemsize   # h2/h3 f32 + cast copy for next matmul
    small = 64 * 4 + 64 * compute_itemsize + 2 * 4        # h1 + double-buffered [1,tb] output
    return x_block + h_live + small


def _mlp_kernel(x_ref,
                w1_ref, b1_ref,
                w2_ref, b2_ref,
                w3_ref, b3_ref,
                w4t_ref, b4_ref,
                o_ref):
    # x arrives in natural [tb, 6] layout.  The first matmul contracts the feature axis of
    # both operands (w1[64,6] . x[tb,6]^T -> [64, tb]) -- the q.k^T flash-attention pattern --
    # so no explicit wrapper- or kernel-side transpose of x is needed.
    x = x_ref[...].astype(w1_ref.dtype)                                   # [tb, 6]
    h = jax.lax.dot_general(
        w1_ref[...], x,
        dimension_numbers=(((1,), (1,)), ((), ())),
        preferred_element_type=jnp.float32) + b1_ref[...]                 # [64, tb]
    h = jnp.maximum(h, 0.0)

    h = jnp.dot(w2_ref[...], h.astype(w2_ref.dtype),
                preferred_element_type=jnp.float32) + b2_ref[...]         # [128, tb]
    h = jnp.maximum(h, 0.0)

    h = jnp.dot(w3_ref[...], h.astype(w3_ref.dtype),
                preferred_element_type=jnp.float32) + b3_ref[...]         # [128, tb]
    h = jnp.maximum(h, 0.0)

    # Final 128 -> 1 layer: broadcast multiply + sublane (XLU) reduction keeps the MXU away
    # from an M=1 matmul and stores a lane-dense [1, tb] row.
    out = jnp.sum(h * w4t_ref[...].astype(jnp.float32), axis=0, keepdims=True) + b4_ref[...]
    o_ref[...] = out.astype(o_ref.dtype)


def ann_forward(x, params, *, tile_b=4096, compute_dtype=jnp.bfloat16):
    """x: [B, 6] float32 -> [B, 1] float32, matching ANNModel.forward.

    params: list of (w, b) in PyTorch nn.Linear layout (w: [out, in], b: [out]).
    compute_dtype: bfloat16 (default, MXU-native on v5e/v6e/v7x, f32 accumulation) or
    float32 for numerics matching the PyTorch module as closely as possible.
    """
    (w1, b1), (w2, b2), (w3, b3), (w4, b4) = params
    B, F_in = x.shape

    # Kernel-side parameter layouts (tiny; recomputed here is negligible).
    w1k, w2k, w3k = (w.astype(compute_dtype) for w in (w1, w2, w3))
    w4t = w4.T.astype(compute_dtype)                                   # [128, 1] column
    b1c, b2c, b3c, b4c = (b.reshape(-1, 1).astype(jnp.float32)
                          for b in (b1, b2, b3, b4))                   # [out, 1] columns
    param_bytes = sum(int(a.size) * a.dtype.itemsize
                      for a in (w1k, w2k, w3k, w4t, b1c, b2c, b3c, b4c))

    # --- Tile selection: large lane-multiple tiles, budgeted against per-chip VMEM. ---
    num_tc, vmem_cap = _chip_profile()
    per_elem = _per_elem_vmem_bytes(jnp.dtype(compute_dtype).itemsize)
    margin = 8 * 1024 * 1024                      # params + Mosaic internal scratch + slack
    tb_cap = max(128, ((vmem_cap - margin) // per_elem) // 128 * 128)

    B128 = _round_up(B, 128)
    tb = max(128, min(_round_up(tile_b, 128), tb_cap, B128))
    n_tiles = pl.cdiv(B128, tb)
    if num_tc > 1 and B128 >= num_tc * 128 and n_tiles % num_tc != 0:
        # Only on multi-TensorCore chips: make the parallel grid split evenly across cores.
        n_tiles = _round_up(n_tiles, num_tc)
        tb = max(128, _round_up(pl.cdiv(B128, n_tiles), 128))
        n_tiles = pl.cdiv(B128, tb)
    B_pad = n_tiles * tb

    # No transpose/relayout pass over x; pad rows only when the batch is ragged.
    x_in = x.astype(jnp.float32)
    if B_pad != B:
        x_in = jnp.pad(x_in, ((0, B_pad - B), (0, 0)))

    def full(a):
        # Whole (tiny) parameter tensor resident every grid step.
        return pl.BlockSpec(a.shape, lambda i: (0, 0))

    flops = 2 * B_pad * (6 * 64 + 64 * 128 + 128 * 128 + 128)
    bytes_accessed = B_pad * (F_in * 4 + 4) + param_bytes

    need = tb * per_elem + param_bytes + 4 * 1024 * 1024
    vmem_limit = int(min(vmem_cap, max(32 * 1024 * 1024, int(need * 1.25))))

    out_t = pl.pallas_call(
        _mlp_kernel,
        out_shape=jax.ShapeDtypeStruct((1, B_pad), jnp.float32),
        grid_spec=pltpu.PrefetchScalarGridSpec(
            num_scalar_prefetch=0,
            grid=(n_tiles,),
            in_specs=[
                pl.BlockSpec((tb, F_in), lambda i: (i, 0)),      # x tile (natural layout)
                full(w1k), full(b1c),
                full(w2k), full(b2c),
                full(w3k), full(b3c),
                full(w4t), full(b4c),
            ],
            out_specs=pl.BlockSpec((1, tb), lambda i: (0, i)),   # lane-dense output row
        ),
        compiler_params=pltpu.CompilerParams(
            dimension_semantics=("parallel",),
            vmem_limit_bytes=vmem_limit),
        cost_estimate=pl.CostEstimate(flops=flops, transcendentals=0,
                                      bytes_accessed=bytes_accessed),
    )(x_in, w1k, b1c, w2k, b2c, w3k, b3c, w4t, b4c)

    # [1, B_pad] -> [B, 1]
    return out_t.reshape(B_pad, 1)[:B]


def init_params(key):
    """Deterministic init matching nn.Linear shapes (PyTorch layout: w [out,in], b [out])."""
    dims = [(6, 64), (64, 128), (128, 128), (128, 1)]
    params = []
    for fan_in, fan_out in dims:
        key, kw, kb = jax.random.split(key, 3)
        bound = 1.0 / (fan_in ** 0.5)  # PyTorch default Linear init range
        w = jax.random.uniform(kw, (fan_out, fan_in), jnp.float32, -bound, bound)
        b = jax.random.uniform(kb, (fan_out,), jnp.float32, -bound, bound)
        params.append((w, b))
    return params


def ann_forward_ref(x, params):
    """Pure-JAX reference of the same forward pass (full f32 precision)."""
    h = x
    n = len(params)
    for idx, (w, b) in enumerate(params):
        h = jnp.dot(h, w.T, precision=jax.lax.Precision.HIGHEST) + b
        if idx < n - 1:
            h = jnp.maximum(h, 0.0)
    return h


if __name__ == "__main__":
    key = jax.random.PRNGKey(0)
    key, kx = jax.random.split(key)
    B = 8
    x = jax.random.normal(kx, (B, 6), jnp.float32)
    params = init_params(key)
    ref = ann_forward_ref(x, params)

    # f32 matmul path (closest numerics to the PyTorch module).
    out_f32 = jax.block_until_ready(ann_forward(x, params, compute_dtype=jnp.float32))
    assert out_f32.shape == (B, 1)
    assert jnp.allclose(out_f32, ref, atol=2e-3, rtol=2e-3), "f32 path mismatch vs reference"

    # Default bf16-matmul path (f32 accumulation) -> looser tolerance.
    out_bf16 = jax.block_until_ready(ann_forward(x, params))
    assert out_bf16.shape == (B, 1)
    assert jnp.allclose(out_bf16, ref, atol=5e-2, rtol=5e-2), "bf16 path mismatch vs reference"

    # Ragged batch exercising a multi-tile grid + row padding.
    key, kx2 = jax.random.split(key)
    B2 = 200
    x2 = jax.random.normal(kx2, (B2, 6), jnp.float32)
    out2 = jax.block_until_ready(
        ann_forward(x2, params, tile_b=128, compute_dtype=jnp.float32))
    ref2 = ann_forward_ref(x2, params)
    assert out2.shape == (B2, 1)
    assert jnp.allclose(out2, ref2, atol=2e-3, rtol=2e-3), "multi-tile path mismatch"

    print("KERNEL_OK")
</pallas_src>

<mosaic_0001>
module attributes {stable_mosaic.version = 11 : i64} {
  func.func @_mlp_kernel(%arg0: i32, %arg1: memref<128x6xf32, #tpu.memory_space<vmem>>, %arg2: memref<64x6xf32, #tpu.memory_space<vmem>>, %arg3: memref<64x1xf32, #tpu.memory_space<vmem>>, %arg4: memref<128x64xf32, #tpu.memory_space<vmem>>, %arg5: memref<128x1xf32, #tpu.memory_space<vmem>>, %arg6: memref<128x128xf32, #tpu.memory_space<vmem>>, %arg7: memref<128x1xf32, #tpu.memory_space<vmem>>, %arg8: memref<128x1xf32, #tpu.memory_space<vmem>>, %arg9: memref<1x1xf32, #tpu.memory_space<vmem>>, %arg10: memref<1x128xf32, #tpu.memory_space<vmem>>) attributes {dimension_semantics = [#tpu.dimension_semantics<parallel>], iteration_bounds = array<i64: 1>, scalar_prefetch = 0 : i64, scratch_operands = 0 : i64, tpu.core_type = #tpu.core_type<tc>, window_params = [{transform_indices = @transform_0, window_bounds = array<i64: 128, 6>}, {pipeline_mode = #tpu.pipeline_mode<synchronous>, transform_indices = @transform_1, window_bounds = array<i64: 64, 6>}, {pipeline_mode = #tpu.pipeline_mode<synchronous>, transform_indices = @transform_2, window_bounds = array<i64: 64, 1>}, {pipeline_mode = #tpu.pipeline_mode<synchronous>, transform_indices = @transform_3, window_bounds = array<i64: 128, 64>}, {pipeline_mode = #tpu.pipeline_mode<synchronous>, transform_indices = @transform_4, window_bounds = array<i64: 128, 1>}, {pipeline_mode = #tpu.pipeline_mode<synchronous>, transform_indices = @transform_5, window_bounds = array<i64: 128, 128>}, {pipeline_mode = #tpu.pipeline_mode<synchronous>, transform_indices = @transform_6, window_bounds = array<i64: 128, 1>}, {pipeline_mode = #tpu.pipeline_mode<synchronous>, transform_indices = @transform_7, window_bounds = array<i64: 128, 1>}, {pipeline_mode = #tpu.pipeline_mode<synchronous>, transform_indices = @transform_8, window_bounds = array<i64: 1, 1>}, {transform_indices = @transform_9, window_bounds = array<i64: 1, 128>}]} {
    %c0 = arith.constant 0 : index
    %c0_0 = arith.constant 0 : index
    %0 = vector.load %arg1[%c0, %c0_0] : memref<128x6xf32, #tpu.memory_space<vmem>>, vector<128x6xf32>
    %c0_1 = arith.constant 0 : index
    %c0_2 = arith.constant 0 : index
    %1 = vector.load %arg2[%c0_1, %c0_2] : memref<64x6xf32, #tpu.memory_space<vmem>>, vector<64x6xf32>
    %cst = arith.constant dense<0.000000e+00> : vector<64x128xf32>
    %2 = tpu.matmul %1, %0, %cst {dimension_numbers = #tpu.dot_dimension_numbers<[1], [1], [0], [0], [0, 0, 1, 0], [], []>} : vector<64x6xf32>, vector<128x6xf32>, vector<64x128xf32> -> vector<64x128xf32>
    %c0_3 = arith.constant 0 : index
    %c0_4 = arith.constant 0 : index
    %3 = vector.load %arg3[%c0_3, %c0_4] : memref<64x1xf32, #tpu.memory_space<vmem>>, vector<64x1xf32>
    %4 = vector.broadcast %3 : vector<64x1xf32> to vector<64x128xf32>
    %5 = arith.addf %2, %4 : vector<64x128xf32>
    %cst_5 = arith.constant 0.000000e+00 : f32
    %6 = vector.broadcast %cst_5 : f32 to vector<64x128xf32>
    %7 = arith.maximumf %5, %6 : vector<64x128xf32>
    %c0_6 = arith.constant 0 : index
    %c0_7 = arith.constant 0 : index
    %8 = vector.load %arg4[%c0_6, %c0_7] : memref<128x64xf32, #tpu.memory_space<vmem>>, vector<128x64xf32>
    %cst_8 = arith.constant dense<0.000000e+00> : vector<128x128xf32>
    %9 = tpu.matmul %8, %7, %cst_8 {dimension_numbers = #tpu.dot_dimension_numbers<[1], [0], [0], [1], [0, 0, 1, 1], [], []>} : vector<128x64xf32>, vector<64x128xf32>, vector<128x128xf32> -> vector<128x128xf32>
    %c0_9 = arith.constant 0 : index
    %c0_10 = arith.constant 0 : index
    %10 = vector.load %arg5[%c0_9, %c0_10] : memref<128x1xf32, #tpu.memory_space<vmem>>, vector<128x1xf32>
    %11 = vector.broadcast %10 : vector<128x1xf32> to vector<128x128xf32>
    %12 = arith.addf %9, %11 : vector<128x128xf32>
    %cst_11 = arith.constant 0.000000e+00 : f32
    %13 = vector.broadcast %cst_11 : f32 to vector<128x128xf32>
    %14 = arith.maximumf %12, %13 : vector<128x128xf32>
    %c0_12 = arith.constant 0 : index
    %c0_13 = arith.constant 0 : index
    %15 = vector.load %arg6[%c0_12, %c0_13] : memref<128x128xf32, #tpu.memory_space<vmem>>, vector<128x128xf32>
    %cst_14 = arith.constant dense<0.000000e+00> : vector<128x128xf32>
    %16 = tpu.matmul %15, %14, %cst_14 {dimension_numbers = #tpu.dot_dimension_numbers<[1], [0], [0], [1], [0, 0, 1, 1], [], []>} : vector<128x128xf32>, vector<128x128xf32>, vector<128x128xf32> -> vector<128x128xf32>
    %c0_15 = arith.constant 0 : index
    %c0_16 = arith.constant 0 : index
    %17 = vector.load %arg7[%c0_15, %c0_16] : memref<128x1xf32, #tpu.memory_space<vmem>>, vector<128x1xf32>
    %18 = vector.broadcast %17 : vector<128x1xf32> to vector<128x128xf32>
    %19 = arith.addf %16, %18 : vector<128x128xf32>
    %cst_17 = arith.constant 0.000000e+00 : f32
    %20 = vector.broadcast %cst_17 : f32 to vector<128x128xf32>
    %21 = arith.maximumf %19, %20 : vector<128x128xf32>
    %c0_18 = arith.constant 0 : index
    %c0_19 = arith.constant 0 : index
    %22 = vector.load %arg8[%c0_18, %c0_19] : memref<128x1xf32, #tpu.memory_space<vmem>>, vector<128x1xf32>
    %23 = vector.broadcast %22 : vector<128x1xf32> to vector<128x128xf32>
    %24 = arith.mulf %21, %23 : vector<128x128xf32>
    %cst_20 = arith.constant dense<0.000000e+00> : vector<128xf32>
    %25 = vector.multi_reduction <add>, %24, %cst_20 [0] : vector<128x128xf32> to vector<128xf32>
    %26 = vector.shape_cast %25 : vector<128xf32> to vector<1x128xf32>
    %c0_21 = arith.constant 0 : index
    %c0_22 = arith.constant 0 : index
    %27 = vector.load %arg9[%c0_21, %c0_22] : memref<1x1xf32, #tpu.memory_space<vmem>>, vector<1x1xf32>
    %28 = vector.broadcast %27 : vector<1x1xf32> to vector<1x128xf32>
    %29 = arith.addf %26, %28 : vector<1x128xf32>
    %c0_23 = arith.constant 0 : index
    %c0_24 = arith.constant 0 : index
    %30 = vector.load %arg10[%c0_23, %c0_24] : memref<1x128xf32, #tpu.memory_space<vmem>>, vector<1x128xf32>
    tpu.vector_store %arg10[%c0_23, %c0_24], %29 {strides = array<i32>} : memref<1x128xf32, #tpu.memory_space<vmem>>, vector<1x128xf32>,
    return
  }
  func.func @transform_0(%arg0: i32) -> (i32, i32) {
    %c0_i32 = arith.constant 0 : i32
    %c0_i32_0 = arith.constant 0 : i32
    return %arg0, %c0_i32 : i32, i32
  }
  func.func @transform_1(%arg0: i32) -> (i32, i32) {
    %c0_i32 = arith.constant 0 : i32
    %c0_i32_0 = arith.constant 0 : i32
    %c0_i32_1 = arith.constant 0 : i32
    return %c0_i32, %c0_i32_0 : i32, i32
  }
  func.func @transform_2(%arg0: i32) -> (i32, i32) {
    %c0_i32 = arith.constant 0 : i32
    %c0_i32_0 = arith.constant 0 : i32
    %c0_i32_1 = arith.constant 0 : i32
    return %c0_i32, %c0_i32_0 : i32, i32
  }
  func.func @transform_3(%arg0: i32) -> (i32, i32) {
    %c0_i32 = arith.constant 0 : i32
    %c0_i32_0 = arith.constant 0 : i32
    %c0_i32_1 = arith.constant 0 : i32
    return %c0_i32, %c0_i32_0 : i32, i32
  }
  func.func @transform_4(%arg0: i32) -> (i32, i32) {
    %c0_i32 = arith.constant 0 : i32
    %c0_i32_0 = arith.constant 0 : i32
    %c0_i32_1 = arith.constant 0 : i32
    return %c0_i32, %c0_i32_0 : i32, i32
  }
  func.func @transform_5(%arg0: i32) -> (i32, i32) {
    %c0_i32 = arith.constant 0 : i32
    %c0_i32_0 = arith.constant 0 : i32
    %c0_i32_1 = arith.constant 0 : i32
    return %c0_i32, %c0_i32_0 : i32, i32
  }
  func.func @transform_6(%arg0: i32) -> (i32, i32) {
    %c0_i32 = arith.constant 0 : i32
    %c0_i32_0 = arith.constant 0 : i32
    %c0_i32_1 = arith.constant 0 : i32
    return %c0_i32, %c0_i32_0 : i32, i32
  }
  func.func @transform_7(%arg0: i32) -> (i32, i32) {
    %c0_i32 = arith.constant 0 : i32
    %c0_i32_0 = arith.constant 0 : i32
    %c0_i32_1 = arith.constant 0 : i32
    return %c0_i32, %c0_i32_0 : i32, i32
  }
  func.func @transform_8(%arg0: i32) -> (i32, i32) {
    %c0_i32 = arith.constant 0 : i32
    %c0_i32_0 = arith.constant 0 : i32
    %c0_i32_1 = arith.constant 0 : i32
    return %c0_i32, %c0_i32_0 : i32, i32
  }
  func.func @transform_9(%arg0: i32) -> (i32, i32) {
    %c0_i32 = arith.constant 0 : i32
    %c0_i32_0 = arith.constant 0 : i32
    return %c0_i32, %arg0 : i32, i32
  }
}

</mosaic_0001>

<llo_original>
// kernel: tpu_custom_call.1
$region0: #{tpu_custom_call.1}
  #allocation0 [shape = 'u32[]', space=smem, size = 0x4, offset = 0x4, fixed_abs, tag = 'smem constant byte address 0x4 - core index']
  #allocation1 [shape = 'u32[144,128]{1,0:T(1,128)}', space=vmem, size = 0x12000, scoped, tag = 'internal scratch']
  #allocation2 [shape = 'f32[1,1]{1,0:T(1,128)S(1)}', space=vmem, size = 0x200, scoped, tag = 'scoped memory for tpu_custom_call.1']
  %s0 = inlined_call_operand.vmem [shape: f32[128,6], index: 0, kind: input, shape index: {}]
  %s1 = inlined_call_operand.vmem [shape: f32[64,6], index: 1, kind: input, shape index: {}]
  %s2 = inlined_call_operand.vmem [shape: f32[64,1], index: 2, kind: input, shape index: {}]
  %s3 = inlined_call_operand.vmem [shape: f32[128,64], index: 3, kind: input, shape index: {}]
  %s4 = inlined_call_operand.vmem [shape: f32[128,1], index: 4, kind: input, shape index: {}]
  %s5 = inlined_call_operand.vmem [shape: f32[128,128], index: 5, kind: input, shape index: {}]
  %s6 = inlined_call_operand.vmem [shape: f32[128,1], index: 6, kind: input, shape index: {}]
  %s7 = inlined_call_operand.vmem [shape: f32[128,1], index: 7, kind: input, shape index: {}]
  %s8 = inlined_call_operand.<no memory space> [shape: f32[1,1], index: 8, kind: input, shape index: {}]
  %s9 = inlined_call_operand.hbm [shape: f32[1,128], index: 9, kind: output, shape index: {}]
  %s10 = sld [smem:[#allocation0]]
  $region46: #{tpu_custom_call.1} parent=0
    _
  %s12 = ssub.s32 1, %s10
  %s13 = scalar_select 0, %s12, %s10
  %v14 = vstv %s8
  %15 = vst [vmem:[#allocation2] sm:$0x1] %v14
  $region1: #{tpu_custom_call.1} parent=0
    #allocation3 [shape = 'u8[512]{0}', space=vmem, size = 0x400, scoped, tag = 'output window, operand 0, single buffered']
    #allocation4 [shape = 's32[1]{0}', space=sflag, size = 0x4, scoped, tag = 'scoped memory for tpu_custom_call.1']
    %16 = vsyncpa [#allocation4], 0
    // Predicated region
    $region2: #{tpu_custom_call.1} parent=1 // pred_check
      _
    $region3: #{tpu_custom_call.1} parent=1 // pred_check_branch
      %18 = sbr.rel (0) target = $region5
    $region4: #{tpu_custom_call.1} parent=1 // pred_region
      _
    $region5: #{tpu_custom_call.1} parent=1 // pred_fallthru
      _
    // Predicated region
    $region6: #{tpu_custom_call.1} parent=1 // pred_check
      _
    $region7: #{tpu_custom_call.1} parent=1 // pred_check_branch
      %20 = sbr.rel (0) target = $region9
    $region8: #{tpu_custom_call.1} parent=1 // pred_region
      _
    $region9: #{tpu_custom_call.1} parent=1 // pred_fallthru
      _
    // Predicated region
    $region10: #{tpu_custom_call.1} parent=1 // pred_check
      _
    $region11: #{tpu_custom_call.1} parent=1 // pred_check_branch
      %22 = sbr.rel (0) target = $region13
    $region12: #{tpu_custom_call.1} parent=1 // pred_region
      _
    $region13: #{tpu_custom_call.1} parent=1 // pred_fallthru
      _
    // Predicated region
    $region14: #{tpu_custom_call.1} parent=1 // pred_check
      _
    $region15: #{tpu_custom_call.1} parent=1 // pred_check_branch
      %24 = sbr.rel (0) target = $region17
    $region16: #{tpu_custom_call.1} parent=1 // pred_region
      _
    $region17: #{tpu_custom_call.1} parent=1 // pred_fallthru
      _
    // Predicated region
    $region18: #{tpu_custom_call.1} parent=1 // pred_check
      _
    $region19: #{tpu_custom_call.1} parent=1 // pred_check_branch
      %26 = sbr.rel (0) target = $region21
    $region20: #{tpu_custom_call.1} parent=1 // pred_region
      _
    $region21: #{tpu_custom_call.1} parent=1 // pred_fallthru
      _
    // Predicated region
    $region22: #{tpu_custom_call.1} parent=1 // pred_check
      _
    $region23: #{tpu_custom_call.1} parent=1 // pred_check_branch
      %28 = sbr.rel (0) target = $region25
    $region24: #{tpu_custom_call.1} parent=1 // pred_region
      _
    $region25: #{tpu_custom_call.1} parent=1 // pred_fallthru
      _
    // Predicated region
    $region26: #{tpu_custom_call.1} parent=1 // pred_check
      _
    $region27: #{tpu_custom_call.1} parent=1 // pred_check_branch
      %30 = sbr.rel (0) target = $region29
    $region28: #{tpu_custom_call.1} parent=1 // pred_region
      _
    $region29: #{tpu_custom_call.1} parent=1 // pred_fallthru
      _
    // Predicated region
    $region30: #{tpu_custom_call.1} parent=1 // pred_check
      _
    $region31: #{tpu_custom_call.1} parent=1 // pred_check_branch
      %32 = sbr.rel (0) target = $region33
    $region32: #{tpu_custom_call.1} parent=1 // pred_region
      _
    $region33: #{tpu_custom_call.1} parent=1 // pred_fallthru
      _
    // Predicated region
    $region34: #{tpu_custom_call.1} parent=1 // pred_check
      _
    $region35: #{tpu_custom_call.1} parent=1 // pred_check_branch
      %34 = sbr.rel (0) target = $region37
    $region36: #{tpu_custom_call.1} parent=1 // pred_region
      _
    $region37: #{tpu_custom_call.1} parent=1 // pred_fallthru
      _
    %v35 = vld [vmem:[%s0] sm:$0xff]
    %v36 = vld [vmem:[%s0 + $0x8] sm:$0xff]
    %v37 = vld [vmem:[%s0 + $0x10] sm:$0xff]
    %v38 = vld [vmem:[%s0 + $0x18] sm:$0xff]
    %v39 = vld [vmem:[%s0 + $0x20] sm:$0xff]
    %v40 = vld [vmem:[%s0 + $0x28] sm:$0xff]
    %v41 = vld [vmem:[%s0 + $0x30] sm:$0xff]
    %v42 = vld [vmem:[%s0 + $0x38] sm:$0xff]
    %v43 = vld [vmem:[%s0 + $0x40] sm:$0xff]
    %v44 = vld [vmem:[%s0 + $0x48] sm:$0xff]
    %v45 = vld [vmem:[%s0 + $0x50] sm:$0xff]
    %v46 = vld [vmem:[%s0 + $0x58] sm:$0xff]
    %v47 = vld [vmem:[%s0 + $0x60] sm:$0xff]
    %v48 = vld [vmem:[%s0 + $0x68] sm:$0xff]
    %v49 = vld [vmem:[%s0 + $0x70] sm:$0xff]
    %v50 = vld [vmem:[%s0 + $0x78] sm:$0xff]
    %v51 = vld [vmem:[%s1] sm:$0xff]
    %v52 = vld [vmem:[%s1 + $0x8] sm:$0xff]
    %v53 = vld [vmem:[%s1 + $0x10] sm:$0xff]
    %v54 = vld [vmem:[%s1 + $0x18] sm:$0xff]
    %v55 = vld [vmem:[%s1 + $0x20] sm:$0xff]
    %v56 = vld [vmem:[%s1 + $0x28] sm:$0xff]
    %v57 = vld [vmem:[%s1 + $0x30] sm:$0xff]
    %v58 = vld [vmem:[%s1 + $0x38] sm:$0xff]
    %v59 = vld [vmem:[%s2] sm:$0xff]
    %v60 = vld [vmem:[%s2 + $0x8] sm:$0xff]
    %v61 = vld [vmem:[%s2 + $0x10] sm:$0xff]
    %v62 = vld [vmem:[%s2 + $0x18] sm:$0xff]
    %v63 = vld [vmem:[%s2 + $0x20] sm:$0xff]
    %v64 = vld [vmem:[%s2 + $0x28] sm:$0xff]
    %v65 = vld [vmem:[%s2 + $0x30] sm:$0xff]
    %v66 = vld [vmem:[%s2 + $0x38] sm:$0xff]
    %68 = vset.pattern.permute.xlu0 0
    %69 = vperm.xlu0 %68, %v59
    %v70 = vpop.permute.xlu0 %69
    %73 = vset.pattern.permute.xlu0 0
    %74 = vperm.xlu0 %73, %v60
    %v75 = vpop.permute.xlu0 %74
    %78 = vset.pattern.permute.xlu0 0
    %79 = vperm.xlu0 %78, %v61
    %v80 = vpop.permute.xlu0 %79
    %83 = vset.pattern.permute.xlu0 0
    %84 = vperm.xlu0 %83, %v62
    %v85 = vpop.permute.xlu0 %84
    %88 = vset.pattern.permute.xlu0 0
    %89 = vperm.xlu0 %88, %v63
    %v90 = vpop.permute.xlu0 %89
    %93 = vset.pattern.permute.xlu0 0
    %94 = vperm.xlu0 %93, %v64
    %v95 = vpop.permute.xlu0 %94
    %98 = vset.pattern.permute.xlu0 0
    %99 = vperm.xlu0 %98, %v65
    %v100 = vpop.permute.xlu0 %99
    %103 = vset.pattern.permute.xlu0 0
    %104 = vperm.xlu0 %103, %v66
    %v105 = vpop.permute.xlu0 %104
    %vm107 = vcmask 48128
    %v109 = vsel %vm107, %v51, 0
    %v112 = vsel %vm107, %v52, 0
    %v115 = vsel %vm107, %v53, 0
    %v118 = vsel %vm107, %v54, 0
    %v121 = vsel %vm107, %v55, 0
    %v124 = vsel %vm107, %v56, 0
    %v127 = vsel %vm107, %v57, 0
    %v130 = vsel %vm107, %v58, 0
    %v133 = vsel %vm107, %v35, 0
    %v136 = vsel %vm107, %v36, 0
    %v139 = vsel %vm107, %v37, 0
    %v142 = vsel %vm107, %v38, 0
    %v145 = vsel %vm107, %v39, 0
    %v148 = vsel %vm107, %v40, 0
    %v151 = vsel %vm107, %v41, 0
    %v154 = vsel %vm107, %v42, 0
    %v157 = vsel %vm107, %v43, 0
    %v160 = vsel %vm107, %v44, 0
    %v163 = vsel %vm107, %v45, 0
    %v166 = vsel %vm107, %v46, 0
    %v169 = vsel %vm107, %v47, 0
    %v172 = vsel %vm107, %v48, 0
    %v175 = vsel %vm107, %v49, 0
    %v178 = vsel %vm107, %v50, 0
    %180 = vmatprep.subr.mxu0 0.0
    %181 = vmatpush1.xpose.msra.mxu0 %v178
    %182 = vmatprep.subr.mxu0 0.0
    %183 = vmatpush1.xpose.msra.mxu0 %v175
    %184 = vmatprep.subr.mxu0 0.0
    %185 = vmatpush1.xpose.msra.mxu0 %v172
    %186 = vmatprep.subr.mxu0 0.0
    %187 = vmatpush1.xpose.msra.mxu0 %v169
    %188 = vmatprep.subr.mxu0 0.0
    %189 = vmatpush1.xpose.msra.mxu0 %v166
    %190 = vmatprep.subr.mxu0 0.0
    %191 = vmatpush1.xpose.msra.mxu0 %v163
    %192 = vmatprep.subr.mxu0 0.0
    %193 = vmatpush1.xpose.msra.mxu0 %v160
    %194 = vmatprep.subr.mxu0 0.0
    %195 = vmatpush1.xpose.msra.mxu0 %v157
    %196 = vmatprep.subr.mxu0 0.0
    %197 = vmatpush1.xpose.msra.mxu0 %v154
    %198 = vmatprep.subr.mxu0 0.0
    %199 = vmatpush1.xpose.msra.mxu0 %v151
    %200 = vmatprep.subr.mxu0 0.0
    %201 = vmatpush1.xpose.msra.mxu0 %v148
    %202 = vmatprep.subr.mxu0 0.0
    %203 = vmatpush1.xpose.msra.mxu0 %v145
    %204 = vmatprep.subr.mxu0 0.0
    %205 = vmatpush1.xpose.msra.mxu0 %v142
    %206 = vmatprep.subr.mxu0 0.0
    %207 = vmatpush1.xpose.msra.mxu0 %v139
    %208 = vmatprep.subr.mxu0 0.0
    %209 = vmatpush1.xpose.msra.mxu0 %v136
    %210 = vmatprep.subr.mxu0 0.0
    %211 = vmatpush1.xpose.msra.mxu0 %v133
    %212 = vmatprep.subr.mxu0 0.0
    %213 = vmatpush2.xpose.msra.mxu0 0.0
    %214 = vmatprep.subr.mxu0 0.0
    %215 = vmatpush2.xpose.msra.mxu0 0.0
    %216 = vmatprep.subr.mxu0 0.0
    %217 = vmatpush2.xpose.msra.mxu0 0.0
    %218 = vmatprep.subr.mxu0 0.0
    %219 = vmatpush2.xpose.msra.mxu0 0.0
    %220 = vmatprep.subr.mxu0 0.0
    %221 = vmatpush2.xpose.msra.mxu0 0.0
    %222 = vmatprep.subr.mxu0 0.0
    %223 = vmatpush2.xpose.msra.mxu0 0.0
    %224 = vmatprep.subr.mxu0 0.0
    %225 = vmatpush2.xpose.msra.mxu0 0.0
    %226 = vmatprep.subr.mxu0 0.0
    %227 = vmatpush2.xpose.msra.mxu0 0.0
    %228 = vmatprep.subr.mxu0 0.0
    %229 = vmatpush2.xpose.msra.mxu0 0.0
    %230 = vmatprep.subr.mxu0 0.0
    %231 = vmatpush2.xpose.msra.mxu0 0.0
    %232 = vmatprep.subr.mxu0 0.0
    %233 = vmatpush2.xpose.msra.mxu0 0.0
    %234 = vmatprep.subr.mxu0 0.0
    %235 = vmatpush2.xpose.msra.mxu0 0.0
    %236 = vmatprep.subr.mxu0 0.0
    %237 = vmatpush2.xpose.msra.mxu0 0.0
    %238 = vmatprep.subr.mxu0 0.0
    %239 = vmatpush2.xpose.msra.mxu0 0.0
    %240 = vmatprep.subr.mxu0 0.0
    %241 = vmatpush2.xpose.msra.mxu0 0.0
    %242 = vmatprep.subr.mxu0 0.0
    %243 = vmatpush2.xpose.msra.mxu0 0.0
    %244 = vmatprep.mubr.f32.mxu0 0.0
    %245 = vmatmul.mubr.f32.gmra.mxu0 %v109
    %v246 = vpop.f32.mrf.mxu0
    %v247 = vadd.f32 %v70, %v246
    %v248 = vpop.f32.mrf.mxu0
    %249 = vmatprep.mubr.f32.mxu0 0.0
    %250 = vmatmul.mubr.f32.gmra.mxu0 %v112
    %v251 = vpop.f32.mrf.mxu0
    %v252 = vadd.f32 %v75, %v251
    %v253 = vpop.f32.mrf.mxu0
    %254 = vmatprep.mubr.f32.mxu0 0.0
    %255 = vmatmul.mubr.f32.gmra.mxu0 %v115
    %v256 = vpop.f32.mrf.mxu0
    %v257 = vadd.f32 %v80, %v256
    %v258 = vpop.f32.mrf.mxu0
    %259 = vmatprep.mubr.f32.mxu0 0.0
    %260 = vmatmul.mubr.f32.gmra.mxu0 %v118
    %v261 = vpop.f32.mrf.mxu0
    %v262 = vadd.f32 %v85, %v261
    %v263 = vpop.f32.mrf.mxu0
    %264 = vmatprep.mubr.f32.mxu0 0.0
    %265 = vmatmul.mubr.f32.gmra.mxu0 %v121
    %v266 = vpop.f32.mrf.mxu0
    %v267 = vadd.f32 %v90, %v266
    %v268 = vpop.f32.mrf.mxu0
    %269 = vmatprep.mubr.f32.mxu0 0.0
    %270 = vmatmul.mubr.f32.gmra.mxu0 %v124
    %v271 = vpop.f32.mrf.mxu0
    %v272 = vadd.f32 %v95, %v271
    %v273 = vpop.f32.mrf.mxu0
    %274 = vmatprep.mubr.f32.mxu0 0.0
    %275 = vmatmul.mubr.f32.gmra.mxu0 %v127
    %v276 = vpop.f32.mrf.mxu0
    %v277 = vadd.f32 %v100, %v276
    %v278 = vpop.f32.mrf.mxu0
    %279 = vmatprep.mubr.f32.mxu0 0.0
    %280 = vmatmul.mubr.f32.gmra.mxu0 %v130
    %v281 = vpop.f32.mrf.mxu0
    %v282 = vadd.f32 %v105, %v281
    %v283 = vpop.f32.mrf.mxu0
    %284 = vdwg.mxu0
    %v285 = vmax.f32 %v247, 0.0
    %v286 = vmax.f32 %v252, 0.0
    %v287 = vmax.f32 %v257, 0.0
    %v288 = vmax.f32 %v262, 0.0
    %v289 = vmax.f32 %v267, 0.0
    %v290 = vmax.f32 %v272, 0.0
    %v291 = vmax.f32 %v277, 0.0
    %v292 = vmax.f32 %v282, 0.0
    %v293 = vld [vmem:[%s3] sm:$0xff]
    %v294 = vld [vmem:[%s3 + $0x8] sm:$0xff]
    %v295 = vld [vmem:[%s3 + $0x10] sm:$0xff]
    %v296 = vld [vmem:[%s3 + $0x18] sm:$0xff]
    %v297 = vld [vmem:[%s3 + $0x20] sm:$0xff]
    %v298 = vld [vmem:[%s3 + $0x28] sm:$0xff]
    %v299 = vld [vmem:[%s3 + $0x30] sm:$0xff]
    %v300 = vld [vmem:[%s3 + $0x38] sm:$0xff]
    %v301 = vld [vmem:[%s3 + $0x40] sm:$0xff]
    %v302 = vld [vmem:[%s3 + $0x48] sm:$0xff]
    %v303 = vld [vmem:[%s3 + $0x50] sm:$0xff]
    %v304 = vld [vmem:[%s3 + $0x58] sm:$0xff]
    %v305 = vld [vmem:[%s3 + $0x60] sm:$0xff]
    %v306 = vld [vmem:[%s3 + $0x68] sm:$0xff]
    %v307 = vld [vmem:[%s3 + $0x70] sm:$0xff]
    %v308 = vld [vmem:[%s3 + $0x78] sm:$0xff]
    %v309 = vld [vmem:[%s4] sm:$0xff]
    %v310 = vld [vmem:[%s4 + $0x8] sm:$0xff]
    %v311 = vld [vmem:[%s4 + $0x10] sm:$0xff]
    %v312 = vld [vmem:[%s4 + $0x18] sm:$0xff]
    %v313 = vld [vmem:[%s4 + $0x20] sm:$0xff]
    %v314 = vld [vmem:[%s4 + $0x28] sm:$0xff]
    %v315 = vld [vmem:[%s4 + $0x30] sm:$0xff]
    %v316 = vld [vmem:[%s4 + $0x38] sm:$0xff]
    %v317 = vld [vmem:[%s4 + $0x40] sm:$0xff]
    %v318 = vld [vmem:[%s4 + $0x48] sm:$0xff]
    %v319 = vld [vmem:[%s4 + $0x50] sm:$0xff]
    %v320 = vld [vmem:[%s4 + $0x58] sm:$0xff]
    %v321 = vld [vmem:[%s4 + $0x60] sm:$0xff]
    %v322 = vld [vmem:[%s4 + $0x68] sm:$0xff]
    %v323 = vld [vmem:[%s4 + $0x70] sm:$0xff]
    %v324 = vld [vmem:[%s4 + $0x78] sm:$0xff]
    %326 = vset.pattern.permute.xlu0 0
    %327 = vperm.xlu0 %326, %v309
    %v328 = vpop.permute.xlu0 %327
    %331 = vset.pattern.permute.xlu0 0
    %332 = vperm.xlu0 %331, %v310
    %v333 = vpop.permute.xlu0 %332
    %336 = vset.pattern.permute.xlu0 0
    %337 = vperm.xlu0 %336, %v311
    %v338 = vpop.permute.xlu0 %337
    %341 = vset.pattern.permute.xlu0 0
    %342 = vperm.xlu0 %341, %v312
    %v343 = vpop.permute.xlu0 %342
    %346 = vset.pattern.permute.xlu0 0
    %347 = vperm.xlu0 %346, %v313
    %v348 = vpop.permute.xlu0 %347
    %351 = vset.pattern.permute.xlu0 0
    %352 = vperm.xlu0 %351, %v314
    %v353 = vpop.permute.xlu0 %352
    %356 = vset.pattern.permute.xlu0 0
    %357 = vperm.xlu0 %356, %v315
    %v358 = vpop.permute.xlu0 %357
    %361 = vset.pattern.permute.xlu0 0
    %362 = vperm.xlu0 %361, %v316
    %v363 = vpop.permute.xlu0 %362
    %366 = vset.pattern.permute.xlu0 0
    %367 = vperm.xlu0 %366, %v317
    %v368 = vpop.permute.xlu0 %367
    %371 = vset.pattern.permute.xlu0 0
    %372 = vperm.xlu0 %371, %v318
    %v373 = vpop.permute.xlu0 %372
    %376 = vset.pattern.permute.xlu0 0
    %377 = vperm.xlu0 %376, %v319
    %v378 = vpop.permute.xlu0 %377
    %381 = vset.pattern.permute.xlu0 0
    %382 = vperm.xlu0 %381, %v320
    %v383 = vpop.permute.xlu0 %382
    %386 = vset.pattern.permute.xlu0 0
    %387 = vperm.xlu0 %386, %v321
    %v388 = vpop.permute.xlu0 %387
    %391 = vset.pattern.permute.xlu0 0
    %392 = vperm.xlu0 %391, %v322
    %v393 = vpop.permute.xlu0 %392
    %396 = vset.pattern.permute.xlu0 0
    %397 = vperm.xlu0 %396, %v323
    %v398 = vpop.permute.xlu0 %397
    %401 = vset.pattern.permute.xlu0 0
    %402 = vperm.xlu0 %401, %v324
    %v403 = vpop.permute.xlu0 %402
    %vm405 = vcmask 523264
    %v407 = vsel %vm405, %v293, 0
    %v410 = vsel %vm405, %v294, 0
    %v413 = vsel %vm405, %v295, 0
    %v416 = vsel %vm405, %v296, 0
    %v419 = vsel %vm405, %v297, 0
    %v422 = vsel %vm405, %v298, 0
    %v425 = vsel %vm405, %v299, 0
    %v428 = vsel %vm405, %v300, 0
    %v431 = vsel %vm405, %v301, 0
    %v434 = vsel %vm405, %v302, 0
    %v437 = vsel %vm405, %v303, 0
    %v440 = vsel %vm405, %v304, 0
    %v443 = vsel %vm405, %v305, 0
    %v446 = vsel %vm405, %v306, 0
    %v449 = vsel %vm405, %v307, 0
    %v452 = vsel %vm405, %v308, 0
    %454 = vmatprep.subr.mxu0 0.0
    %455 = vmatpush1.msra.mxu0 0.0
    %456 = vmatprep.subr.mxu0 0.0
    %457 = vmatpush1.msra.mxu0 0.0
    %458 = vmatprep.subr.mxu0 0.0
    %459 = vmatpush1.msra.mxu0 0.0
    %460 = vmatprep.subr.mxu0 0.0
    %461 = vmatpush1.msra.mxu0 0.0
    %462 = vmatprep.subr.mxu0 0.0
    %463 = vmatpush1.msra.mxu0 0.0
    %464 = vmatprep.subr.mxu0 0.0
    %465 = vmatpush1.msra.mxu0 0.0
    %466 = vmatprep.subr.mxu0 0.0
    %467 = vmatpush1.msra.mxu0 0.0
    %468 = vmatprep.subr.mxu0 0.0
    %469 = vmatpush1.msra.mxu0 0.0
    %470 = vmatprep.subr.mxu0 0.0
    %471 = vmatpush1.msra.mxu0 %v292
    %472 = vmatprep.subr.mxu0 0.0
    %473 = vmatpush1.msra.mxu0 %v291
    %474 = vmatprep.subr.mxu0 0.0
    %475 = vmatpush1.msra.mxu0 %v290
    %476 = vmatprep.subr.mxu0 0.0
    %477 = vmatpush1.msra.mxu0 %v289
    %478 = vmatprep.subr.mxu0 0.0
    %479 = vmatpush1.msra.mxu0 %v288
    %480 = vmatprep.subr.mxu0 0.0
    %481 = vmatpush1.msra.mxu0 %v287
    %482 = vmatprep.subr.mxu0 0.0
    %483 = vmatpush1.msra.mxu0 %v286
    %484 = vmatprep.subr.mxu0 0.0
    %485 = vmatpush1.msra.mxu0 %v285
    %486 = vmatprep.subr.mxu0 0.0
    %487 = vmatpush2.msra.mxu0 0.0
    %488 = vmatprep.subr.mxu0 0.0
    %489 = vmatpush2.msra.mxu0 0.0
    %490 = vmatprep.subr.mxu0 0.0
    %491 = vmatpush2.msra.mxu0 0.0
    %492 = vmatprep.subr.mxu0 0.0
    %493 = vmatpush2.msra.mxu0 0.0
    %494 = vmatprep.subr.mxu0 0.0
    %495 = vmatpush2.msra.mxu0 0.0
    %496 = vmatprep.subr.mxu0 0.0
    %497 = vmatpush2.msra.mxu0 0.0
    %498 = vmatprep.subr.mxu0 0.0
    %499 = vmatpush2.msra.mxu0 0.0
    %500 = vmatprep.subr.mxu0 0.0
    %501 = vmatpush2.msra.mxu0 0.0
    %502 = vmatprep.subr.mxu0 0.0
    %503 = vmatpush2.msra.mxu0 0.0
    %504 = vmatprep.subr.mxu0 0.0
    %505 = vmatpush2.msra.mxu0 0.0
    %506 = vmatprep.subr.mxu0 0.0
    %507 = vmatpush2.msra.mxu0 0.0
    %508 = vmatprep.subr.mxu0 0.0
    %509 = vmatpush2.msra.mxu0 0.0
    %510 = vmatprep.subr.mxu0 0.0
    %511 = vmatpush2.msra.mxu0 0.0
    %512 = vmatprep.subr.mxu0 0.0
    %513 = vmatpush2.msra.mxu0 0.0
    %514 = vmatprep.subr.mxu0 0.0
    %515 = vmatpush2.msra.mxu0 0.0
    %516 = vmatprep.subr.mxu0 0.0
    %517 = vmatpush2.msra.mxu0 0.0
    %518 = vmatprep.mubr.f32.mxu0 0.0
    %519 = vmatmul.mubr.f32.gmra.mxu0 %v407
    %v520 = vpop.f32.mrf.mxu0
    %v521 = vadd.f32 %v328, %v520
    %v522 = vpop.f32.mrf.mxu0
    %523 = vmatprep.mubr.f32.mxu0 0.0
    %524 = vmatmul.mubr.f32.gmra.mxu0 %v410
    %v525 = vpop.f32.mrf.mxu0
    %v526 = vadd.f32 %v333, %v525
    %v527 = vpop.f32.mrf.mxu0
    %528 = vmatprep.mubr.f32.mxu0 0.0
    %529 = vmatmul.mubr.f32.gmra.mxu0 %v413
    %v530 = vpop.f32.mrf.mxu0
    %v531 = vadd.f32 %v338, %v530
    %v532 = vpop.f32.mrf.mxu0
    %533 = vmatprep.mubr.f32.mxu0 0.0
    %534 = vmatmul.mubr.f32.gmra.mxu0 %v416
    %v535 = vpop.f32.mrf.mxu0
    %v536 = vadd.f32 %v343, %v535
    %v537 = vpop.f32.mrf.mxu0
    %538 = vmatprep.mubr.f32.mxu0 0.0
    %539 = vmatmul.mubr.f32.gmra.mxu0 %v419
    %v540 = vpop.f32.mrf.mxu0
    %v541 = vadd.f32 %v348, %v540
    %v542 = vpop.f32.mrf.mxu0
    %543 = vmatprep.mubr.f32.mxu0 0.0
    %544 = vmatmul.mubr.f32.gmra.mxu0 %v422
    %v545 = vpop.f32.mrf.mxu0
    %v546 = vadd.f32 %v353, %v545
    %v547 = vpop.f32.mrf.mxu0
    %548 = vmatprep.mubr.f32.mxu0 0.0
    %549 = vmatmul.mubr.f32.gmra.mxu0 %v425
    %v550 = vpop.f32.mrf.mxu0
    %v551 = vadd.f32 %v358, %v550
    %v552 = vpop.f32.mrf.mxu0
    %553 = vmatprep.mubr.f32.mxu0 0.0
    %554 = vmatmul.mubr.f32.gmra.mxu0 %v428
    %v555 = vpop.f32.mrf.mxu0
    %v556 = vadd.f32 %v363, %v555
    %v557 = vpop.f32.mrf.mxu0
    %558 = vmatprep.mubr.f32.mxu0 0.0
    %559 = vmatmul.mubr.f32.gmra.mxu0 %v431
    %v560 = vpop.f32.mrf.mxu0
    %v561 = vadd.f32 %v368, %v560
    %v562 = vpop.f32.mrf.mxu0
    %563 = vmatprep.mubr.f32.mxu0 0.0
    %564 = vmatmul.mubr.f32.gmra.mxu0 %v434
    %v565 = vpop.f32.mrf.mxu0
    %v566 = vadd.f32 %v373, %v565
    %v567 = vpop.f32.mrf.mxu0
    %568 = vmatprep.mubr.f32.mxu0 0.0
    %569 = vmatmul.mubr.f32.gmra.mxu0 %v437
    %v570 = vpop.f32.mrf.mxu0
    %v571 = vadd.f32 %v378, %v570
    %v572 = vpop.f32.mrf.mxu0
    %573 = vmatprep.mubr.f32.mxu0 0.0
    %574 = vmatmul.mubr.f32.gmra.mxu0 %v440
    %v575 = vpop.f32.mrf.mxu0
    %v576 = vadd.f32 %v383, %v575
    %v577 = vpop.f32.mrf.mxu0
    %578 = vmatprep.mubr.f32.mxu0 0.0
    %579 = vmatmul.mubr.f32.gmra.mxu0 %v443
    %v580 = vpop.f32.mrf.mxu0
    %v581 = vadd.f32 %v388, %v580
    %v582 = vpop.f32.mrf.mxu0
    %583 = vmatprep.mubr.f32.mxu0 0.0
    %584 = vmatmul.mubr.f32.gmra.mxu0 %v446
    %v585 = vpop.f32.mrf.mxu0
    %v586 = vadd.f32 %v393, %v585
    %v587 = vpop.f32.mrf.mxu0
    %588 = vmatprep.mubr.f32.mxu0 0.0
    %589 = vmatmul.mubr.f32.gmra.mxu0 %v449
    %v590 = vpop.f32.mrf.mxu0
    %v591 = vadd.f32 %v398, %v590
    %v592 = vpop.f32.mrf.mxu0
    %593 = vmatprep.mubr.f32.mxu0 0.0
    %594 = vmatmul.mubr.f32.gmra.mxu0 %v452
    %v595 = vpop.f32.mrf.mxu0
    %v596 = vadd.f32 %v403, %v595
    %v597 = vpop.f32.mrf.mxu0
    %598 = vdwg.mxu0
    %v599 = vmax.f32 %v521, 0.0
    %v600 = vmax.f32 %v526, 0.0
    %v601 = vmax.f32 %v531, 0.0
    %v602 = vmax.f32 %v536, 0.0
    %v603 = vmax.f32 %v541, 0.0
    %v604 = vmax.f32 %v546, 0.0
    %v605 = vmax.f32 %v551, 0.0
    %v606 = vmax.f32 %v556, 0.0
    %v607 = vmax.f32 %v561, 0.0
    %v608 = vmax.f32 %v566, 0.0
    %v609 = vmax.f32 %v571, 0.0
    %v610 = vmax.f32 %v576, 0.0
    %v611 = vmax.f32 %v581, 0.0
    %v612 = vmax.f32 %v586, 0.0
    %v613 = vmax.f32 %v591, 0.0
    %v614 = vmax.f32 %v596, 0.0
    %v615 = vld [vmem:[%s5] sm:$0xff]
    %v616 = vld [vmem:[%s5 + $0x8] sm:$0xff]
    %v617 = vld [vmem:[%s5 + $0x10] sm:$0xff]
    %v618 = vld [vmem:[%s5 + $0x18] sm:$0xff]
    %v619 = vld [vmem:[%s5 + $0x20] sm:$0xff]
    %v620 = vld [vmem:[%s5 + $0x28] sm:$0xff]
    %v621 = vld [vmem:[%s5 + $0x30] sm:$0xff]
    %v622 = vld [vmem:[%s5 + $0x38] sm:$0xff]
    %v623 = vld [vmem:[%s5 + $0x40] sm:$0xff]
    %v624 = vld [vmem:[%s5 + $0x48] sm:$0xff]
    %v625 = vld [vmem:[%s5 + $0x50] sm:$0xff]
    %v626 = vld [vmem:[%s5 + $0x58] sm:$0xff]
    %v627 = vld [vmem:[%s5 + $0x60] sm:$0xff]
    %v628 = vld [vmem:[%s5 + $0x68] sm:$0xff]
    %v629 = vld [vmem:[%s5 + $0x70] sm:$0xff]
    %v630 = vld [vmem:[%s5 + $0x78] sm:$0xff]
    %v631 = vld [vmem:[%s6] sm:$0xff]
    %v632 = vld [vmem:[%s6 + $0x8] sm:$0xff]
    %v633 = vld [vmem:[%s6 + $0x10] sm:$0xff]
    %v634 = vld [vmem:[%s6 + $0x18] sm:$0xff]
    %v635 = vld [vmem:[%s6 + $0x20] sm:$0xff]
    %v636 = vld [vmem:[%s6 + $0x28] sm:$0xff]
    %v637 = vld [vmem:[%s6 + $0x30] sm:$0xff]
    %v638 = vld [vmem:[%s6 + $0x38] sm:$0xff]
    %v639 = vld [vmem:[%s6 + $0x40] sm:$0xff]
    %v640 = vld [vmem:[%s6 + $0x48] sm:$0xff]
    %v641 = vld [vmem:[%s6 + $0x50] sm:$0xff]
    %v642 = vld [vmem:[%s6 + $0x58] sm:$0xff]
    %v643 = vld [vmem:[%s6 + $0x60] sm:$0xff]
    %v644 = vld [vmem:[%s6 + $0x68] sm:$0xff]
    %v645 = vld [vmem:[%s6 + $0x70] sm:$0xff]
    %v646 = vld [vmem:[%s6 + $0x78] sm:$0xff]
    %648 = vset.pattern.permute.xlu0 0
    %649 = vperm.xlu0 %648, %v631
    %v650 = vpop.permute.xlu0 %649
    %653 = vset.pattern.permute.xlu0 0
    %654 = vperm.xlu0 %653, %v632
    %v655 = vpop.permute.xlu0 %654
    %658 = vset.pattern.permute.xlu0 0
    %659 = vperm.xlu0 %658, %v633
    %v660 = vpop.permute.xlu0 %659
    %663 = vset.pattern.permute.xlu0 0
    %664 = vperm.xlu0 %663, %v634
    %v665 = vpop.permute.xlu0 %664
    %668 = vset.pattern.permute.xlu0 0
    %669 = vperm.xlu0 %668, %v635
    %v670 = vpop.permute.xlu0 %669
    %673 = vset.pattern.permute.xlu0 0
    %674 = vperm.xlu0 %673, %v636
    %v675 = vpop.permute.xlu0 %674
    %678 = vset.pattern.permute.xlu0 0
    %679 = vperm.xlu0 %678, %v637
    %v680 = vpop.permute.xlu0 %679
    %683 = vset.pattern.permute.xlu0 0
    %684 = vperm.xlu0 %683, %v638
    %v685 = vpop.permute.xlu0 %684
    %688 = vset.pattern.permute.xlu0 0
    %689 = vperm.xlu0 %688, %v639
    %v690 = vpop.permute.xlu0 %689
    %693 = vset.pattern.permute.xlu0 0
    %694 = vperm.xlu0 %693, %v640
    %v695 = vpop.permute.xlu0 %694
    %698 = vset.pattern.permute.xlu0 0
    %699 = vperm.xlu0 %698, %v641
    %v700 = vpop.permute.xlu0 %699
    %703 = vset.pattern.permute.xlu0 0
    %704 = vperm.xlu0 %703, %v642
    %v705 = vpop.permute.xlu0 %704
    %708 = vset.pattern.permute.xlu0 0
    %709 = vperm.xlu0 %708, %v643
    %v710 = vpop.permute.xlu0 %709
    %713 = vset.pattern.permute.xlu0 0
    %714 = vperm.xlu0 %713, %v644
    %v715 = vpop.permute.xlu0 %714
    %718 = vset.pattern.permute.xlu0 0
    %719 = vperm.xlu0 %718, %v645
    %v720 = vpop.permute.xlu0 %719
    %723 = vset.pattern.permute.xlu0 0
    %724 = vperm.xlu0 %723, %v646
    %v725 = vpop.permute.xlu0 %724
    %727 = vmatprep.subr.mxu0 0.0
    %728 = vmatpush1.msra.mxu0 %v614
    %729 = vmatprep.subr.mxu0 0.0
    %730 = vmatpush1.msra.mxu0 %v613
    %731 = vmatprep.subr.mxu0 0.0
    %732 = vmatpush1.msra.mxu0 %v612
    %733 = vmatprep.subr.mxu0 0.0
    %734 = vmatpush1.msra.mxu0 %v611
    %735 = vmatprep.subr.mxu0 0.0
    %736 = vmatpush1.msra.mxu0 %v610
    %737 = vmatprep.subr.mxu0 0.0
    %738 = vmatpush1.msra.mxu0 %v609
    %739 = vmatprep.subr.mxu0 0.0
    %740 = vmatpush1.msra.mxu0 %v608
    %741 = vmatprep.subr.mxu0 0.0
    %742 = vmatpush1.msra.mxu0 %v607
    %743 = vmatprep.subr.mxu0 0.0
    %744 = vmatpush1.msra.mxu0 %v606
    %745 = vmatprep.subr.mxu0 0.0
    %746 = vmatpush1.msra.mxu0 %v605
    %747 = vmatprep.subr.mxu0 0.0
    %748 = vmatpush1.msra.mxu0 %v604
    %749 = vmatprep.subr.mxu0 0.0
    %750 = vmatpush1.msra.mxu0 %v603
    %751 = vmatprep.subr.mxu0 0.0
    %752 = vmatpush1.msra.mxu0 %v602
    %753 = vmatprep.subr.mxu0 0.0
    %754 = vmatpush1.msra.mxu0 %v601
    %755 = vmatprep.subr.mxu0 0.0
    %756 = vmatpush1.msra.mxu0 %v600
    %757 = vmatprep.subr.mxu0 0.0
    %758 = vmatpush1.msra.mxu0 %v599
    %759 = vmatprep.subr.mxu0 0.0
    %760 = vmatpush2.msra.mxu0 0.0
    %761 = vmatprep.subr.mxu0 0.0
    %762 = vmatpush2.msra.mxu0 0.0
    %763 = vmatprep.subr.mxu0 0.0
    %764 = vmatpush2.msra.mxu0 0.0
    %765 = vmatprep.subr.mxu0 0.0
    %766 = vmatpush2.msra.mxu0 0.0
    %767 = vmatprep.subr.mxu0 0.0
    %768 = vmatpush2.msra.mxu0 0.0
    %769 = vmatprep.subr.mxu0 0.0
    %770 = vmatpush2.msra.mxu0 0.0
    %771 = vmatprep.subr.mxu0 0.0
    %772 = vmatpush2.msra.mxu0 0.0
    %773 = vmatprep.subr.mxu0 0.0
    %774 = vmatpush2.msra.mxu0 0.0
    %775 = vmatprep.subr.mxu0 0.0
    %776 = vmatpush2.msra.mxu0 0.0
    %777 = vmatprep.subr.mxu0 0.0
    %778 = vmatpush2.msra.mxu0 0.0
    %779 = vmatprep.subr.mxu0 0.0
    %780 = vmatpush2.msra.mxu0 0.0
    %781 = vmatprep.subr.mxu0 0.0
    %782 = vmatpush2.msra.mxu0 0.0
    %783 = vmatprep.subr.mxu0 0.0
    %784 = vmatpush2.msra.mxu0 0.0
    %785 = vmatprep.subr.mxu0 0.0
    %786 = vmatpush2.msra.mxu0 0.0
    %787 = vmatprep.subr.mxu0 0.0
    %788 = vmatpush2.msra.mxu0 0.0
    %789 = vmatprep.subr.mxu0 0.0
    %790 = vmatpush2.msra.mxu0 0.0
    %791 = vmatprep.mubr.f32.mxu0 0.0
    %792 = vmatmul.mubr.f32.gmra.mxu0 %v615
    %v793 = vpop.f32.mrf.mxu0
    %v794 = vadd.f32 %v650, %v793
    %v795 = vpop.f32.mrf.mxu0
    %796 = vmatprep.mubr.f32.mxu0 0.0
    %797 = vmatmul.mubr.f32.gmra.mxu0 %v616
    %v798 = vpop.f32.mrf.mxu0
    %v799 = vadd.f32 %v655, %v798
    %v800 = vpop.f32.mrf.mxu0
    %801 = vmatprep.mubr.f32.mxu0 0.0
    %802 = vmatmul.mubr.f32.gmra.mxu0 %v617
    %v803 = vpop.f32.mrf.mxu0
    %v804 = vadd.f32 %v660, %v803
    %v805 = vpop.f32.mrf.mxu0
    %806 = vmatprep.mubr.f32.mxu0 0.0
    %807 = vmatmul.mubr.f32.gmra.mxu0 %v618
    %v808 = vpop.f32.mrf.mxu0
    %v809 = vadd.f32 %v665, %v808
    %v810 = vpop.f32.mrf.mxu0
    %811 = vmatprep.mubr.f32.mxu0 0.0
    %812 = vmatmul.mubr.f32.gmra.mxu0 %v619
    %v813 = vpop.f32.mrf.mxu0
    %v814 = vadd.f32 %v670, %v813
    %v815 = vpop.f32.mrf.mxu0
    %816 = vmatprep.mubr.f32.mxu0 0.0
    %817 = vmatmul.mubr.f32.gmra.mxu0 %v620
    %v818 = vpop.f32.mrf.mxu0
    %v819 = vadd.f32 %v675, %v818
    %v820 = vpop.f32.mrf.mxu0
    %821 = vmatprep.mubr.f32.mxu0 0.0
    %822 = vmatmul.mubr.f32.gmra.mxu0 %v621
    %v823 = vpop.f32.mrf.mxu0
    %v824 = vadd.f32 %v680, %v823
    %v825 = vpop.f32.mrf.mxu0
    %826 = vmatprep.mubr.f32.mxu0 0.0
    %827 = vmatmul.mubr.f32.gmra.mxu0 %v622
    %v828 = vpop.f32.mrf.mxu0
    %v829 = vadd.f32 %v685, %v828
    %v830 = vpop.f32.mrf.mxu0
    %831 = vmatprep.mubr.f32.mxu0 0.0
    %832 = vmatmul.mubr.f32.gmra.mxu0 %v623
    %v833 = vpop.f32.mrf.mxu0
    %v834 = vadd.f32 %v690, %v833
    %v835 = vpop.f32.mrf.mxu0
    %836 = vmatprep.mubr.f32.mxu0 0.0
    %837 = vmatmul.mubr.f32.gmra.mxu0 %v624
    %v838 = vpop.f32.mrf.mxu0
    %v839 = vadd.f32 %v695, %v838
    %v840 = vpop.f32.mrf.mxu0
    %841 = vmatprep.mubr.f32.mxu0 0.0
    %842 = vmatmul.mubr.f32.gmra.mxu0 %v625
    %v843 = vpop.f32.mrf.mxu0
    %v844 = vadd.f32 %v700, %v843
    %v845 = vpop.f32.mrf.mxu0
    %846 = vmatprep.mubr.f32.mxu0 0.0
    %847 = vmatmul.mubr.f32.gmra.mxu0 %v626
    %v848 = vpop.f32.mrf.mxu0
    %v849 = vadd.f32 %v705, %v848
    %v850 = vpop.f32.mrf.mxu0
    %851 = vmatprep.mubr.f32.mxu0 0.0
    %852 = vmatmul.mubr.f32.gmra.mxu0 %v627
    %v853 = vpop.f32.mrf.mxu0
    %v854 = vadd.f32 %v710, %v853
    %v855 = vpop.f32.mrf.mxu0
    %856 = vmatprep.mubr.f32.mxu0 0.0
    %857 = vmatmul.mubr.f32.gmra.mxu0 %v628
    %v858 = vpop.f32.mrf.mxu0
    %v859 = vadd.f32 %v715, %v858
    %v860 = vpop.f32.mrf.mxu0
    %861 = vmatprep.mubr.f32.mxu0 0.0
    %862 = vmatmul.mubr.f32.gmra.mxu0 %v629
    %v863 = vpop.f32.mrf.mxu0
    %v864 = vadd.f32 %v720, %v863
    %v865 = vpop.f32.mrf.mxu0
    %866 = vmatprep.mubr.f32.mxu0 0.0
    %867 = vmatmul.mubr.f32.gmra.mxu0 %v630
    %v868 = vpop.f32.mrf.mxu0
    %v869 = vadd.f32 %v725, %v868
    %v870 = vpop.f32.mrf.mxu0
    %871 = vdwg.mxu0
    %v872 = vmax.f32 %v794, 0.0
    %v873 = vmax.f32 %v799, 0.0
    %v874 = vmax.f32 %v804, 0.0
    %v875 = vmax.f32 %v809, 0.0
    %v876 = vmax.f32 %v814, 0.0
    %v877 = vmax.f32 %v819, 0.0
    %v878 = vmax.f32 %v824, 0.0
    %v879 = vmax.f32 %v829, 0.0
    %v880 = vmax.f32 %v834, 0.0
    %v881 = vmax.f32 %v839, 0.0
    %v882 = vmax.f32 %v844, 0.0
    %v883 = vmax.f32 %v849, 0.0
    %v884 = vmax.f32 %v854, 0.0
    %v885 = vmax.f32 %v859, 0.0
    %v886 = vmax.f32 %v864, 0.0
    %v887 = vmax.f32 %v869, 0.0
    %v888 = vld [vmem:[%s7] sm:$0xff]
    %v889 = vld [vmem:[%s7 + $0x8] sm:$0xff]
    %v890 = vld [vmem:[%s7 + $0x10] sm:$0xff]
    %v891 = vld [vmem:[%s7 + $0x18] sm:$0xff]
    %v892 = vld [vmem:[%s7 + $0x20] sm:$0xff]
    %v893 = vld [vmem:[%s7 + $0x28] sm:$0xff]
    %v894 = vld [vmem:[%s7 + $0x30] sm:$0xff]
    %v895 = vld [vmem:[%s7 + $0x38] sm:$0xff]
    %v896 = vld [vmem:[%s7 + $0x40] sm:$0xff]
    %v897 = vld [vmem:[%s7 + $0x48] sm:$0xff]
    %v898 = vld [vmem:[%s7 + $0x50] sm:$0xff]
    %v899 = vld [vmem:[%s7 + $0x58] sm:$0xff]
    %v900 = vld [vmem:[%s7 + $0x60] sm:$0xff]
    %v901 = vld [vmem:[%s7 + $0x68] sm:$0xff]
    %v902 = vld [vmem:[%s7 + $0x70] sm:$0xff]
    %v903 = vld [vmem:[%s7 + $0x78] sm:$0xff]
    %905 = vset.pattern.permute.xlu0 0
    %906 = vperm.xlu0 %905, %v888
    %v907 = vpop.permute.xlu0 %906
    %910 = vset.pattern.permute.xlu0 0
    %911 = vperm.xlu0 %910, %v889
    %v912 = vpop.permute.xlu0 %911
    %915 = vset.pattern.permute.xlu0 0
    %916 = vperm.xlu0 %915, %v890
    %v917 = vpop.permute.xlu0 %916
    %920 = vset.pattern.permute.xlu0 0
    %921 = vperm.xlu0 %920, %v891
    %v922 = vpop.permute.xlu0 %921
    %925 = vset.pattern.permute.xlu0 0
    %926 = vperm.xlu0 %925, %v892
    %v927 = vpop.permute.xlu0 %926
    %930 = vset.pattern.permute.xlu0 0
    %931 = vperm.xlu0 %930, %v893
    %v932 = vpop.permute.xlu0 %931
    %935 = vset.pattern.permute.xlu0 0
    %936 = vperm.xlu0 %935, %v894
    %v937 = vpop.permute.xlu0 %936
    %940 = vset.pattern.permute.xlu0 0
    %941 = vperm.xlu0 %940, %v895
    %v942 = vpop.permute.xlu0 %941
    %945 = vset.pattern.permute.xlu0 0
    %946 = vperm.xlu0 %945, %v896
    %v947 = vpop.permute.xlu0 %946
    %950 = vset.pattern.permute.xlu0 0
    %951 = vperm.xlu0 %950, %v897
    %v952 = vpop.permute.xlu0 %951
    %955 = vset.pattern.permute.xlu0 0
    %956 = vperm.xlu0 %955, %v898
    %v957 = vpop.permute.xlu0 %956
    %960 = vset.pattern.permute.xlu0 0
    %961 = vperm.xlu0 %960, %v899
    %v962 = vpop.permute.xlu0 %961
    %965 = vset.pattern.permute.xlu0 0
    %966 = vperm.xlu0 %965, %v900
    %v967 = vpop.permute.xlu0 %966
    %970 = vset.pattern.permute.xlu0 0
    %971 = vperm.xlu0 %970, %v901
    %v972 = vpop.permute.xlu0 %971
    %975 = vset.pattern.permute.xlu0 0
    %976 = vperm.xlu0 %975, %v902
    %v977 = vpop.permute.xlu0 %976
    %980 = vset.pattern.permute.xlu0 0
    %981 = vperm.xlu0 %980, %v903
    %v982 = vpop.permute.xlu0 %981
    %v984 = vmul.f32 %v872, %v907
    %v985 = vmul.f32 %v873, %v912
    %v986 = vmul.f32 %v874, %v917
    %v987 = vmul.f32 %v875, %v922
    %v988 = vmul.f32 %v876, %v927
    %v989 = vmul.f32 %v877, %v932
    %v990 = vmul.f32 %v878, %v937
    %v991 = vmul.f32 %v879, %v942
    %v992 = vmul.f32 %v880, %v947
    %v993 = vmul.f32 %v881, %v952
    %v994 = vmul.f32 %v882, %v957
    %v995 = vmul.f32 %v883, %v962
    %v996 = vmul.f32 %v884, %v967
    %v997 = vmul.f32 %v885, %v972
    %v998 = vmul.f32 %v886, %v977
    %v999 = vmul.f32 %v887, %v982
    %v1000 = vadd.f32 %v984, %v985
    %v1001 = vadd.f32 %v1000, %v986
    %v1002 = vadd.f32 %v1001, %v987
    %v1003 = vadd.f32 %v1002, %v988
    %v1004 = vadd.f32 %v1003, %v989
    %v1005 = vadd.f32 %v1004, %v990
    %v1006 = vadd.f32 %v1005, %v991
    %v1007 = vadd.f32 %v1006, %v992
    %v1008 = vadd.f32 %v1007, %v993
    %v1009 = vadd.f32 %v1008, %v994
    %v1010 = vadd.f32 %v1009, %v995
    %v1011 = vadd.f32 %v1010, %v996
    %v1012 = vadd.f32 %v1011, %v997
    %v1013 = vadd.f32 %v1012, %v998
    %v1014 = vadd.f32 %v1013, %v999
    %v1015 = vrot.slane %v1014, 4
    %v1016 = vadd.f32 %v1014, %v1015
    %v1017 = vrot.slane %v1016, 2
    %v1018 = vadd.f32 %v1016, %v1017
    %v1019 = vrot.slane %v1018, 1
    %v1020 = vadd.f32 %v1018, %v1019
    %v1021 = vld [vmem:[#allocation2] sm:$0x1]
    %1023 = vset.pattern.permute.xlu0 0
    %1024 = vperm.xlu0 %1023, %v1021
    %v1025 = vpop.permute.xlu0 %1024
    %v1027 = vlaneseq
    %v1028 = vshrl.u32 %v1027, 7
    %v1029 = vsub.s32 0, %v1028
    %v1030 = vrot.slane %v1025, %v1029
    %v1031 = vadd.f32 %v1020, %v1030
    %1032 = vst [vmem:[#allocation3] sm:$0x1] %v1031
    // Predicated region
    $region38: #{tpu_custom_call.1} parent=1 // pred_check
      _
    $region39: #{tpu_custom_call.1} parent=1 // pred_check_branch
      %1034 = sbr.rel (0) target = $region41
    $region40: #{tpu_custom_call.1} parent=1 // pred_region
      %s1036 = ssub.s32 16, 16
      %1037 = vsyncadd [#allocation4], %s1036
      %s1039 = sshll.u32 [#allocation3], 4
      %s1040 = int_to_ptr.vmem [resolvable:$true] %s1039
      %1042 = dma.vmem_to_hbm [thread:$0]  %s1040, 16, %s9, [#allocation4]
    $region41: #{tpu_custom_call.1} parent=1 // pred_fallthru
      _
    // Predicated region
    $region42: #{tpu_custom_call.1} parent=1 // pred_check
      _
    $region43: #{tpu_custom_call.1} parent=1 // pred_check_branch
      %1044 = sbr.rel (0) target = $region45
    $region44: #{tpu_custom_call.1} parent=1 // pred_region
      %1045 = dma.done [#allocation4], 16
    $region45: #{tpu_custom_call.1} parent=1 // pred_fallthru
      _
    %1046 = vsyncpa [#allocation4], 1

</llo_original>
